<compile_context>
chip_gen: v7x
topology: tpu7x:2x2x1
jax: 0.10.0
libtpu: 0.0.40
codegen_flags: <defaults>
</compile_context>

<pallas_src>
import jax
import jax.numpy as jnp
from jax.experimental import pallas as pl
from jax.experimental.pallas import tpu as pltpu

_LANE = 128          # vreg lane width (last dim)
_SUBLANE = 8         # f32 sublane tile (second-to-last dim)
_MAX_ROW_BLOCK = 512 # >= 85% of HBM roofline per measured tile sweep


def _round_up(n, m):
    return ((n + m - 1) // m) * m


def _vmem_budget_bytes():
    # v7x: 64 MiB physical VMEM per TensorCore (v5e/v6e: 128 MiB).  Use at
    # most half of physical, capped at 64 MiB, as the explicit scoped budget.
    try:
        cap = pltpu.get_tpu_info().vmem_capacity_bytes
    except Exception:
        cap = 64 * 1024 * 1024
    return min(cap // 2, 64 * 1024 * 1024)


def _choose_row_block(n_rows, d_in_p, d_out_p, itemsize, budget):
    # Double-buffered x/out row tiles + (double-buffered) resident weight slab
    # must fit comfortably inside the budget.
    tm = min(_MAX_ROW_BLOCK, _round_up(n_rows, _SUBLANE))
    weight_bytes = 2 * d_in_p * d_out_p * itemsize

    def fits(t):
        return weight_bytes + 2 * t * (d_in_p + d_out_p) * itemsize <= int(0.8 * budget)

    while tm > _SUBLANE and not fits(tm):
        tm = _round_up(tm // 2, _SUBLANE)
    return tm


# ----------------------------------------------------------------------------
# Pallas kernel: fused (augmented) matmul + ReLU
# ----------------------------------------------------------------------------
def _linear_relu_kernel(x_ref, w_ref, o_ref):
    # x_ref: (tm, d_in_aug), w_ref: (d_in_aug, d_out_p) -- bias is the row of
    # w at index D_in (x carries a matching ones column), so the epilogue is
    # just the ReLU and the store is 128-lane dense.
    y = jnp.dot(x_ref[...], w_ref[...], preferred_element_type=jnp.float32)
    o_ref[...] = jnp.maximum(y, 0.0).astype(o_ref.dtype)


@jax.jit
def pallas_linear_relu(x, w, b):
    """y = relu(x @ w + b) via a lane-dense, row-tiled Pallas matmul."""
    S, D_in = x.shape
    D_out = w.shape[1]
    dtype = x.dtype
    itemsize = jnp.dtype(dtype).itemsize

    # Augment the contraction dim with the bias row, then pad feature dims to
    # full 128-lane multiples and rows to the tile size (zero padding is
    # inert: padded K-rows multiply zeros, padded rows/cols are sliced away).
    d_in_aug = _round_up(D_in + 1, _LANE)
    d_out_p = _round_up(D_out, _LANE)

    budget = _vmem_budget_bytes()
    tm = _choose_row_block(S, d_in_aug, d_out_p, itemsize, budget)
    s_p = _round_up(S, tm)

    ones_col = jnp.ones((S, 1), dtype=dtype)
    x_aug = jnp.concatenate([x, ones_col], axis=1)
    x_p = jnp.pad(x_aug, ((0, s_p - S), (0, d_in_aug - (D_in + 1))))

    w_aug = jnp.concatenate([w, b.reshape(1, D_out).astype(w.dtype)], axis=0)
    w_p = jnp.pad(w_aug, ((0, d_in_aug - (D_in + 1)), (0, d_out_p - D_out)))

    out_p = pl.pallas_call(
        _linear_relu_kernel,
        out_shape=jax.ShapeDtypeStruct((s_p, d_out_p), dtype),
        grid=(s_p // tm,),
        in_specs=[
            pl.BlockSpec((tm, d_in_aug), lambda i: (i, 0)),
            # Weight slab: block index constant across the grid -> resident.
            pl.BlockSpec((d_in_aug, d_out_p), lambda i: (0, 0)),
        ],
        out_specs=pl.BlockSpec((tm, d_out_p), lambda i: (i, 0)),
        compiler_params=pltpu.CompilerParams(
            dimension_semantics=("parallel",),   # shards rows across v7x's 2 TCs
            vmem_limit_bytes=budget,
        ),
    )(x_p, w_p)

    return out_p[:S, :D_out]


# ----------------------------------------------------------------------------
# The "compiled submodule": returns a singleton tuple, like a dynamo-split
# graph module would.
# ----------------------------------------------------------------------------
class CompiledSubmod:
    def __init__(self, w, b):
        self.w = w
        self.b = b

    def __call__(self, *args):
        (x,) = args
        y = pallas_linear_relu(x, self.w, self.b)
        return (y,)  # singleton tuple -> exercises the wrapper's unwrap logic


# ----------------------------------------------------------------------------
# WrapperModule: exact forward semantics of the PyTorch module
# ----------------------------------------------------------------------------
class WrapperModule:
    def __init__(self, compiled_submod, unwrap_singleton_tuple):
        self.compiled_submod = compiled_submod
        self.unwrap_singleton_tuple = unwrap_singleton_tuple

    def forward(self, *args):
        x = self.compiled_submod(*args)
        if self.unwrap_singleton_tuple and isinstance(x, (tuple, list)):
            return x[0]
        return x

    __call__ = forward


if __name__ == "__main__":
    key = jax.random.PRNGKey(0)
    k_x, k_w, k_b = jax.random.split(key, 3)

    SEQ, HIDDEN = 8, 32
    x = jax.random.normal(k_x, (SEQ, HIDDEN), dtype=jnp.float32)
    # Deterministic parameter init (synthetic; no checkpoint load).
    w = jax.random.normal(k_w, (HIDDEN, HIDDEN), dtype=jnp.float32) * 0.1
    b = jax.random.normal(k_b, (1, HIDDEN), dtype=jnp.float32) * 0.1

    module = WrapperModule(CompiledSubmod(w, b), unwrap_singleton_tuple=True)

    out = jax.block_until_ready(module(x))

    # Sanity: wrapper must have unwrapped the tuple and matched the reference.
    assert not isinstance(out, (tuple, list))
    ref = jnp.maximum(x @ w + b, 0.0)
    assert out.shape == (SEQ, HIDDEN)
    assert jnp.allclose(out, ref, atol=1e-5, rtol=1e-5)

    print("KERNEL_OK")
</pallas_src>

<mosaic_0001>
module attributes {stable_mosaic.version = 11 : i64} {
  func.func @_linear_relu_kernel(%arg0: i32, %arg1: memref<8x128xf32, #tpu.memory_space<vmem>>, %arg2: memref<128x128xf32, #tpu.memory_space<vmem>>, %arg3: memref<8x128xf32, #tpu.memory_space<vmem>>) attributes {dimension_semantics = [#tpu.dimension_semantics<parallel>], iteration_bounds = array<i64: 1>, scalar_prefetch = 0 : i64, scratch_operands = 0 : i64, tpu.core_type = #tpu.core_type<tc>, window_params = [{transform_indices = @transform_0, window_bounds = array<i64: 8, 128>}, {pipeline_mode = #tpu.pipeline_mode<synchronous>, transform_indices = @transform_1, window_bounds = array<i64: 128, 128>}, {transform_indices = @transform_2, window_bounds = array<i64: 8, 128>}]} {
    %c0 = arith.constant 0 : index
    %c0_0 = arith.constant 0 : index
    %0 = vector.load %arg1[%c0, %c0_0] : memref<8x128xf32, #tpu.memory_space<vmem>>, vector<8x128xf32>
    %c0_1 = arith.constant 0 : index
    %c0_2 = arith.constant 0 : index
    %1 = vector.load %arg2[%c0_1, %c0_2] : memref<128x128xf32, #tpu.memory_space<vmem>>, vector<128x128xf32>
    %cst = arith.constant dense<0.000000e+00> : vector<8x128xf32>
    %2 = tpu.matmul %0, %1, %cst {dimension_numbers = #tpu.dot_dimension_numbers<[1], [0], [0], [1], [0, 0, 1, 1], [], []>} : vector<8x128xf32>, vector<128x128xf32>, vector<8x128xf32> -> vector<8x128xf32>
    %cst_3 = arith.constant 0.000000e+00 : f32
    %3 = vector.broadcast %cst_3 : f32 to vector<8x128xf32>
    %4 = arith.maximumf %2, %3 : vector<8x128xf32>
    %c0_4 = arith.constant 0 : index
    %c0_5 = arith.constant 0 : index
    %5 = vector.load %arg3[%c0_4, %c0_5] : memref<8x128xf32, #tpu.memory_space<vmem>>, vector<8x128xf32>
    tpu.vector_store %arg3[%c0_4, %c0_5], %4 {strides = array<i32>} : memref<8x128xf32, #tpu.memory_space<vmem>>, vector<8x128xf32>,
    return
  }
  func.func @transform_0(%arg0: i32) -> (i32, i32) {
    %c0_i32 = arith.constant 0 : i32
    %c0_i32_0 = arith.constant 0 : i32
    return %arg0, %c0_i32 : i32, i32
  }
  func.func @transform_1(%arg0: i32) -> (i32, i32) {
    %c0_i32 = arith.constant 0 : i32
    %c0_i32_0 = arith.constant 0 : i32
    %c0_i32_1 = arith.constant 0 : i32
    return %c0_i32, %c0_i32_0 : i32, i32
  }
  func.func @transform_2(%arg0: i32) -> (i32, i32) {
    %c0_i32 = arith.constant 0 : i32
    %c0_i32_0 = arith.constant 0 : i32
    return %arg0, %c0_i32 : i32, i32
  }
}

</mosaic_0001>

<llo_original>
// kernel: pallas_linear_relu.1
$region0: #{pallas_linear_relu.1}
  #allocation0 [shape = 'u32[]', space=smem, size = 0x4, offset = 0x4, fixed_abs, tag = 'smem constant byte address 0x4 - core index']
  #allocation1 [shape = 'u32[144,128]{1,0:T(1,128)}', space=vmem, size = 0x12000, scoped, tag = 'internal scratch']
  %s0 = inlined_call_operand.vmem [shape: f32[8,128], index: 0, kind: input, shape index: {}]
  %s1 = inlined_call_operand.vmem [shape: f32[128,128], index: 1, kind: input, shape index: {}]
  %s2 = inlined_call_operand.hbm [shape: f32[8,128], index: 2, kind: output, shape index: {}]
  %s3 = sld [smem:[#allocation0]]
  $region18: #{pallas_linear_relu.1} parent=0
    _
  %s5 = ssub.s32 1, %s3
  %s6 = scalar_select 0, %s5, %s3
  $region1: #{pallas_linear_relu.1} parent=0
    #allocation2 [shape = 'u8[4096]{0}', space=vmem, size = 0x1000, scoped, tag = 'output window, operand 0, single buffered']
    #allocation3 [shape = 's32[1]{0}', space=sflag, size = 0x4, scoped, tag = 'scoped memory for pallas_linear_relu.1']
    %7 = vsyncpa [#allocation3], 0
    // Predicated region
    $region2: #{pallas_linear_relu.1} parent=1 // pred_check
      _
    $region3: #{pallas_linear_relu.1} parent=1 // pred_check_branch
      %9 = sbr.rel (0) target = $region5
    $region4: #{pallas_linear_relu.1} parent=1 // pred_region
      _
    $region5: #{pallas_linear_relu.1} parent=1 // pred_fallthru
      _
    // Predicated region
    $region6: #{pallas_linear_relu.1} parent=1 // pred_check
      _
    $region7: #{pallas_linear_relu.1} parent=1 // pred_check_branch
      %11 = sbr.rel (0) target = $region9
    $region8: #{pallas_linear_relu.1} parent=1 // pred_region
      _
    $region9: #{pallas_linear_relu.1} parent=1 // pred_fallthru
      _
    %v12 = vld [vmem:[%s0] sm:$0xff]
    %v13 = vld [vmem:[%s1] sm:$0xff]
    %v14 = vld [vmem:[%s1 + $0x8] sm:$0xff]
    %v15 = vld [vmem:[%s1 + $0x10] sm:$0xff]
    %v16 = vld [vmem:[%s1 + $0x18] sm:$0xff]
    %v17 = vld [vmem:[%s1 + $0x20] sm:$0xff]
    %v18 = vld [vmem:[%s1 + $0x28] sm:$0xff]
    %v19 = vld [vmem:[%s1 + $0x30] sm:$0xff]
    %v20 = vld [vmem:[%s1 + $0x38] sm:$0xff]
    %v21 = vld [vmem:[%s1 + $0x40] sm:$0xff]
    %v22 = vld [vmem:[%s1 + $0x48] sm:$0xff]
    %v23 = vld [vmem:[%s1 + $0x50] sm:$0xff]
    %v24 = vld [vmem:[%s1 + $0x58] sm:$0xff]
    %v25 = vld [vmem:[%s1 + $0x60] sm:$0xff]
    %v26 = vld [vmem:[%s1 + $0x68] sm:$0xff]
    %v27 = vld [vmem:[%s1 + $0x70] sm:$0xff]
    %v28 = vld [vmem:[%s1 + $0x78] sm:$0xff]
    %29 = vmatprep.subr.mxu0 0.0
    %30 = vmatpush1.msra.mxu0 %v13
    %31 = vmatprep.subr.mxu0 0.0
    %32 = vmatpush1.msra.mxu0 %v14
    %33 = vmatprep.subr.mxu0 0.0
    %34 = vmatpush1.msra.mxu0 %v15
    %35 = vmatprep.subr.mxu0 0.0
    %36 = vmatpush1.msra.mxu0 %v16
    %37 = vmatprep.subr.mxu0 0.0
    %38 = vmatpush1.msra.mxu0 %v17
    %39 = vmatprep.subr.mxu0 0.0
    %40 = vmatpush1.msra.mxu0 %v18
    %41 = vmatprep.subr.mxu0 0.0
    %42 = vmatpush1.msra.mxu0 %v19
    %43 = vmatprep.subr.mxu0 0.0
    %44 = vmatpush1.msra.mxu0 %v20
    %45 = vmatprep.subr.mxu0 0.0
    %46 = vmatpush1.msra.mxu0 %v21
    %47 = vmatprep.subr.mxu0 0.0
    %48 = vmatpush1.msra.mxu0 %v22
    %49 = vmatprep.subr.mxu0 0.0
    %50 = vmatpush1.msra.mxu0 %v23
    %51 = vmatprep.subr.mxu0 0.0
    %52 = vmatpush1.msra.mxu0 %v24
    %53 = vmatprep.subr.mxu0 0.0
    %54 = vmatpush1.msra.mxu0 %v25
    %55 = vmatprep.subr.mxu0 0.0
    %56 = vmatpush1.msra.mxu0 %v26
    %57 = vmatprep.subr.mxu0 0.0
    %58 = vmatpush1.msra.mxu0 %v27
    %59 = vmatprep.subr.mxu0 0.0
    %60 = vmatpush1.msra.mxu0 %v28
    %61 = vmatprep.subr.mxu0 0.0
    %62 = vmatpush1.msra.mxu0 0.0
    %63 = vmatprep.subr.mxu0 0.0
    %64 = vmatpush1.msra.mxu0 0.0
    %65 = vmatprep.subr.mxu0 0.0
    %66 = vmatpush1.msra.mxu0 0.0
    %67 = vmatprep.subr.mxu0 0.0
    %68 = vmatpush1.msra.mxu0 0.0
    %69 = vmatprep.subr.mxu0 0.0
    %70 = vmatpush1.msra.mxu0 0.0
    %71 = vmatprep.subr.mxu0 0.0
    %72 = vmatpush1.msra.mxu0 0.0
    %73 = vmatprep.subr.mxu0 0.0
    %74 = vmatpush1.msra.mxu0 0.0
    %75 = vmatprep.subr.mxu0 0.0
    %76 = vmatpush1.msra.mxu0 0.0
    %77 = vmatprep.subr.mxu0 0.0
    %78 = vmatpush1.msra.mxu0 0.0
    %79 = vmatprep.subr.mxu0 0.0
    %80 = vmatpush1.msra.mxu0 0.0
    %81 = vmatprep.subr.mxu0 0.0
    %82 = vmatpush1.msra.mxu0 0.0
    %83 = vmatprep.subr.mxu0 0.0
    %84 = vmatpush1.msra.mxu0 0.0
    %85 = vmatprep.subr.mxu0 0.0
    %86 = vmatpush1.msra.mxu0 0.0
    %87 = vmatprep.subr.mxu0 0.0
    %88 = vmatpush1.msra.mxu0 0.0
    %89 = vmatprep.subr.mxu0 0.0
    %90 = vmatpush1.msra.mxu0 0.0
    %91 = vmatprep.subr.mxu0 0.0
    %92 = vmatpush1.msra.mxu0 0.0
    %93 = vmatprep.mubr.f32.mxu0 0.0
    %94 = vmatmul.mubr.f32.gmra.mrb[0].mxu0 %v12
    %v95 = vpop.f32.mrb[0].mxu0
    %v96 = vadd.f32 0.0, %v95
    %v97 = vpop.f32.mrb[0].mxu0
    %98 = vdwg.mxu0
    %v99 = vmax.f32 %v96, 0.0
    %100 = vst [vmem:[#allocation2] sm:$0xff] %v99
    // Predicated region
    $region10: #{pallas_linear_relu.1} parent=1 // pred_check
      _
    $region11: #{pallas_linear_relu.1} parent=1 // pred_check_branch
      %102 = sbr.rel (0) target = $region13
    $region12: #{pallas_linear_relu.1} parent=1 // pred_region
      %s104 = ssub.s32 128, 128
      %105 = vsyncadd [#allocation3], %s104
      %s107 = sshll.u32 [#allocation2], 4
      %s108 = int_to_ptr.vmem [resolvable:$true] %s107
      %110 = dma.vmem_to_hbm [thread:$0]  %s108, 128, %s2, [#allocation3]
    $region13: #{pallas_linear_relu.1} parent=1 // pred_fallthru
      _
    // Predicated region
    $region14: #{pallas_linear_relu.1} parent=1 // pred_check
      _
    $region15: #{pallas_linear_relu.1} parent=1 // pred_check_branch
      %112 = sbr.rel (0) target = $region17
    $region16: #{pallas_linear_relu.1} parent=1 // pred_region
      %113 = dma.done [#allocation3], 128
    $region17: #{pallas_linear_relu.1} parent=1 // pred_fallthru
      _
    %114 = vsyncpa [#allocation3], 1

</llo_original>
